<compile_context>
chip_gen: v7x
topology: tpu7x:2x2x1
jax: 0.10.0
libtpu: 0.0.40
codegen_flags: <defaults>
</compile_context>

<pallas_src>
import functools

import jax
import jax.numpy as jnp
from jax.experimental import pallas as pl
from jax.experimental.pallas import tpu as pltpu

EPS = 1e-5


# ---------------------------------------------------------------------------
# Kernel: 2 streamed matmuls + 2 ReLUs + fused 64->1 projection (lane-dense).
# ---------------------------------------------------------------------------
def _mlp_kernel(x_ref, w1_ref, w2_ref, w34_ref, bias_ref, b34_ref, o_ref):
    x = x_ref[...]                                    # (TB, D) bf16

    b1 = bias_ref[:, 0:128]                           # (1, 128) f32 (aligned)
    b2 = bias_ref[:, 128:192]                         # (1, 64)  f32 (aligned)

    # fc1 (+ folded bn1) + relu     (dropout is identity in eval mode)
    h = jnp.dot(x, w1_ref[...], preferred_element_type=jnp.float32) + b1
    h = jnp.maximum(h, 0.0)

    # fc2 (+ folded bn2) + relu     (dropout is identity in eval mode)
    h = jnp.dot(h.astype(jnp.bfloat16), w2_ref[...],
                preferred_element_type=jnp.float32) + b2
    h = jnp.maximum(h, 0.0)

    # Fused fc3@fc4 projection, emitted directly as a lane-dense row:
    #   (1, 64) @ (TB, 64)^T -> (1, TB)   (NT matmul, f32 accumulation)
    out = jax.lax.dot_general(
        w34_ref[...], h.astype(jnp.bfloat16),
        dimension_numbers=(((1,), (1,)), ((), ())),
        preferred_element_type=jnp.float32)
    out = out + b34_ref[0]                            # scalar bias from SMEM

    o_ref[...] = out.astype(o_ref.dtype)              # (1, TB)


# ---------------------------------------------------------------------------
# One-time parameter preparation: fold eval-mode BN, fuse fc3*fc4, cast bf16.
# ---------------------------------------------------------------------------
def prepare_params(p, eps=EPS):
    s1 = p["g1"] * jax.lax.rsqrt(p["v1"] + eps)                 # (1, 128)
    w1f = (p["w1"] * s1).astype(jnp.bfloat16)                   # (D, 128) bf16
    b1f = (p["b1"] - p["m1"]) * s1 + p["be1"]                   # (1, 128) f32

    s2 = p["g2"] * jax.lax.rsqrt(p["v2"] + eps)                 # (1, 64)
    w2f = (p["w2"] * s2).astype(jnp.bfloat16)                   # (128, 64) bf16
    b2f = (p["b2"] - p["m2"]) * s2 + p["be2"]                   # (1, 64) f32

    w34 = (p["w3"] @ p["w4"]).reshape(1, -1).astype(jnp.bfloat16)  # (1, 64)
    b34 = (p["b3"] @ p["w4"] + p["b4"]).reshape(1)                 # (1,) f32

    bias_pack = jnp.concatenate([b1f, b2f], axis=1)             # (1, 192) f32
    return dict(w1=w1f, w2=w2f, w34=w34, bias=bias_pack, b34=b34)


def _round_up(n, m):
    return ((n + m - 1) // m) * m


def _cdiv(a, b):
    return (a + b - 1) // b


def _batch_tiling(B, block_b):
    """Pick (TB, Bp, n_blocks).

    TB is a multiple of 128 whenever n_blocks > 1 (needed for the lane-dense
    (1, TB) output blocks) and padding waste is kept small by deriving TB
    from B instead of rounding B up to a fixed tile.
    For large B we prefer >=2 blocks so both v7x TensorCores get work.
    """
    n = _cdiv(B, block_b)
    if n == 1:
        # Try a 2-way split (v7x megacore) if the extra padding stays <~12.5%.
        bp2 = 2 * _round_up(_cdiv(B, 2), 128)
        if B >= 1024 and bp2 * 8 <= B * 9:
            return bp2 // 2, bp2, 2
        tb = _round_up(B, 16)               # single block: bf16 sublane pack
        return tb, tb, 1
    tb = _round_up(_cdiv(B, n), 128)
    return tb, tb * n, n


# ---------------------------------------------------------------------------
# Wrapper (jit it; parameter folding is NOT done here).
# ---------------------------------------------------------------------------
@functools.partial(jax.jit, static_argnames=("block_b",))
def regression_model_forward(x, prepared, block_b=2048):
    """x: [B, input_dim] float32. Returns [B, 1] float32."""
    B, D = x.shape
    TB, Bp, n_blocks = _batch_tiling(B, block_b)

    xb = x.astype(jnp.bfloat16)
    if Bp != B:
        xb = jnp.pad(xb, ((0, Bp - B), (0, 0)))

    w1 = prepared["w1"]
    w2 = prepared["w2"]
    w34 = prepared["w34"]
    bias = prepared["bias"]
    b34 = prepared["b34"]

    in_specs = [
        pl.BlockSpec((TB, D), lambda i: (i, 0)),        # x: streamed on batch
        pl.BlockSpec(w1.shape, lambda i: (0, 0)),       # resident in VMEM
        pl.BlockSpec(w2.shape, lambda i: (0, 0)),
        pl.BlockSpec(w34.shape, lambda i: (0, 0)),
        pl.BlockSpec(bias.shape, lambda i: (0, 0)),
        pl.BlockSpec(memory_space=pltpu.MemorySpace.SMEM),   # b34 scalar
    ]
    out_specs = pl.BlockSpec((1, TB), lambda i: (0, i))       # lane-dense row

    out = pl.pallas_call(
        _mlp_kernel,
        out_shape=jax.ShapeDtypeStruct((1, Bp), jnp.float32),
        grid=(n_blocks,),
        in_specs=in_specs,
        out_specs=out_specs,
        compiler_params=pltpu.CompilerParams(
            dimension_semantics=("parallel",),
        ),
    )(xb, w1, w2, w34, bias, b34)

    return out.reshape(Bp, 1)[:B]


# ---------------------------------------------------------------------------
# Deterministic params (shapes match the PyTorch module) and a pure-JAX
# reference implementing the ORIGINAL (unfolded, f32) math.
# ---------------------------------------------------------------------------
def init_params(key, input_dim):
    ks = jax.random.split(key, 16)
    f32 = jnp.float32

    def lin(kw, kb, fan_in, fan_out):
        bound = 1.0 / jnp.sqrt(fan_in)
        w = jax.random.uniform(kw, (fan_in, fan_out), f32, -bound, bound)
        b = jax.random.uniform(kb, (1, fan_out), f32, -bound, bound)
        return w, b

    w1, b1 = lin(ks[0], ks[1], input_dim, 128)
    w2, b2 = lin(ks[2], ks[3], 128, 64)
    w3, b3 = lin(ks[4], ks[5], 64, 32)
    w4, b4 = lin(ks[6], ks[7], 32, 1)

    g1 = 1.0 + 0.1 * jax.random.normal(ks[8], (1, 128), f32)
    be1 = 0.1 * jax.random.normal(ks[9], (1, 128), f32)
    m1 = 0.05 * jax.random.normal(ks[10], (1, 128), f32)
    v1 = 1.0 + 0.1 * jnp.abs(jax.random.normal(ks[11], (1, 128), f32))

    g2 = 1.0 + 0.1 * jax.random.normal(ks[12], (1, 64), f32)
    be2 = 0.1 * jax.random.normal(ks[13], (1, 64), f32)
    m2 = 0.05 * jax.random.normal(ks[14], (1, 64), f32)
    v2 = 1.0 + 0.1 * jnp.abs(jax.random.normal(ks[15], (1, 64), f32))

    return dict(w1=w1, b1=b1, g1=g1, be1=be1, m1=m1, v1=v1,
                w2=w2, b2=b2, g2=g2, be2=be2, m2=m2, v2=v2,
                w3=w3, b3=b3, w4=w4, b4=b4)


def reference_forward(x, p):
    h = x @ p["w1"] + p["b1"]
    h = (h - p["m1"]) * jax.lax.rsqrt(p["v1"] + EPS) * p["g1"] + p["be1"]
    h = jnp.maximum(h, 0.0)
    h = h @ p["w2"] + p["b2"]
    h = (h - p["m2"]) * jax.lax.rsqrt(p["v2"] + EPS) * p["g2"] + p["be2"]
    h = jnp.maximum(h, 0.0)
    h = h @ p["w3"] + p["b3"]
    return h @ p["w4"] + p["b4"]


if __name__ == "__main__":
    key = jax.random.PRNGKey(0)
    k_param, k_x = jax.random.split(key)

    B, INPUT_DIM = 8, 32
    params = init_params(k_param, INPUT_DIM)
    x = jax.random.normal(k_x, (B, INPUT_DIM), jnp.float32)

    prepared = prepare_params(params)          # one-time fold / cast / pack
    out = regression_model_forward(x, prepared)
    out = jax.block_until_ready(out)

    ref = reference_forward(x, params)
    assert out.shape == (B, 1), out.shape
    # bf16 weights/activations (f32 accumulation) vs. f32 reference: loosen tol.
    assert jnp.allclose(out, ref, atol=5e-2, rtol=5e-2), (out, ref)

    print("KERNEL_OK")
</pallas_src>

<mosaic_0001>
module attributes {stable_mosaic.version = 11 : i64} {
  func.func @_mlp_kernel(%arg0: i32, %arg1: memref<16x32xbf16, #tpu.memory_space<vmem>>, %arg2: memref<32x128xbf16, #tpu.memory_space<vmem>>, %arg3: memref<128x64xbf16, #tpu.memory_space<vmem>>, %arg4: memref<1x64xbf16, #tpu.memory_space<vmem>>, %arg5: memref<1x192xf32, #tpu.memory_space<vmem>>, %arg6: memref<1xf32, #tpu.memory_space<smem>>, %arg7: memref<1x16xf32, #tpu.memory_space<vmem>>) attributes {dimension_semantics = [#tpu.dimension_semantics<parallel>], iteration_bounds = array<i64: 1>, scalar_prefetch = 0 : i64, scratch_operands = 0 : i64, tpu.core_type = #tpu.core_type<tc>, window_params = [{transform_indices = @transform_0, window_bounds = array<i64: 16, 32>}, {pipeline_mode = #tpu.pipeline_mode<synchronous>, transform_indices = @transform_1, window_bounds = array<i64: 32, 128>}, {pipeline_mode = #tpu.pipeline_mode<synchronous>, transform_indices = @transform_2, window_bounds = array<i64: 128, 64>}, {pipeline_mode = #tpu.pipeline_mode<synchronous>, transform_indices = @transform_3, window_bounds = array<i64: 1, 64>}, {pipeline_mode = #tpu.pipeline_mode<synchronous>, transform_indices = @transform_4, window_bounds = array<i64: 1, 192>}, {transform_indices = @transform_5, window_bounds = array<i64: 1>}, {transform_indices = @transform_6, window_bounds = array<i64: 1, 16>}]} {
    %c0 = arith.constant 0 : index
    %c0_0 = arith.constant 0 : index
    %0 = vector.load %arg1[%c0, %c0_0] : memref<16x32xbf16, #tpu.memory_space<vmem>>, vector<16x32xbf16>
    %c0_1 = arith.constant 0 : index
    %c0_2 = arith.constant 0 : index
    %1 = vector.load %arg5[%c0_1, %c0_2] : memref<1x192xf32, #tpu.memory_space<vmem>>, vector<1x128xf32>
    %c0_3 = arith.constant 0 : index
    %c128 = arith.constant 128 : index
    %2 = vector.load %arg5[%c0_3, %c128] : memref<1x192xf32, #tpu.memory_space<vmem>>, vector<1x64xf32>
    %c0_4 = arith.constant 0 : index
    %c0_5 = arith.constant 0 : index
    %3 = vector.load %arg2[%c0_4, %c0_5] : memref<32x128xbf16, #tpu.memory_space<vmem>>, vector<32x128xbf16>
    %cst = arith.constant dense<0.000000e+00> : vector<16x128xf32>
    %4 = tpu.matmul %0, %3, %cst {dimension_numbers = #tpu.dot_dimension_numbers<[1], [0], [0], [1], [0, 0, 1, 1], [], []>} : vector<16x32xbf16>, vector<32x128xbf16>, vector<16x128xf32> -> vector<16x128xf32>
    %5 = vector.broadcast %1 : vector<1x128xf32> to vector<16x128xf32>
    %6 = arith.addf %4, %5 : vector<16x128xf32>
    %cst_6 = arith.constant 0.000000e+00 : f32
    %7 = vector.broadcast %cst_6 : f32 to vector<16x128xf32>
    %8 = arith.maximumf %6, %7 : vector<16x128xf32>
    %9 = arith.truncf %8 : vector<16x128xf32> to vector<16x128xbf16>
    %c0_7 = arith.constant 0 : index
    %c0_8 = arith.constant 0 : index
    %10 = vector.load %arg3[%c0_7, %c0_8] : memref<128x64xbf16, #tpu.memory_space<vmem>>, vector<128x64xbf16>
    %cst_9 = arith.constant dense<0.000000e+00> : vector<16x64xf32>
    %11 = tpu.matmul %9, %10, %cst_9 {dimension_numbers = #tpu.dot_dimension_numbers<[1], [0], [0], [1], [0, 0, 1, 1], [], []>} : vector<16x128xbf16>, vector<128x64xbf16>, vector<16x64xf32> -> vector<16x64xf32>
    %12 = vector.broadcast %2 : vector<1x64xf32> to vector<16x64xf32>
    %13 = arith.addf %11, %12 : vector<16x64xf32>
    %cst_10 = arith.constant 0.000000e+00 : f32
    %14 = vector.broadcast %cst_10 : f32 to vector<16x64xf32>
    %15 = arith.maximumf %13, %14 : vector<16x64xf32>
    %c0_11 = arith.constant 0 : index
    %c0_12 = arith.constant 0 : index
    %16 = vector.load %arg4[%c0_11, %c0_12] : memref<1x64xbf16, #tpu.memory_space<vmem>>, vector<1x64xbf16>
    %17 = arith.truncf %15 : vector<16x64xf32> to vector<16x64xbf16>
    %cst_13 = arith.constant dense<0.000000e+00> : vector<1x16xf32>
    %18 = tpu.matmul %16, %17, %cst_13 {dimension_numbers = #tpu.dot_dimension_numbers<[1], [1], [0], [0], [0, 0, 1, 0], [], []>} : vector<1x64xbf16>, vector<16x64xbf16>, vector<1x16xf32> -> vector<1x16xf32>
    %c0_14 = arith.constant 0 : index
    %19 = memref.load %arg6[%c0_14] : memref<1xf32, #tpu.memory_space<smem>>
    %20 = vector.broadcast %19 : f32 to vector<1x16xf32>
    %21 = arith.addf %18, %20 : vector<1x16xf32>
    %c0_15 = arith.constant 0 : index
    %c0_16 = arith.constant 0 : index
    %22 = vector.load %arg7[%c0_15, %c0_16] : memref<1x16xf32, #tpu.memory_space<vmem>>, vector<1x16xf32>
    tpu.vector_store %arg7[%c0_15, %c0_16], %21 {strides = array<i32>} : memref<1x16xf32, #tpu.memory_space<vmem>>, vector<1x16xf32>,
    return
  }
  func.func @transform_0(%arg0: i32) -> (i32, i32) {
    %c0_i32 = arith.constant 0 : i32
    %c0_i32_0 = arith.constant 0 : i32
    return %arg0, %c0_i32 : i32, i32
  }
  func.func @transform_1(%arg0: i32) -> (i32, i32) {
    %c0_i32 = arith.constant 0 : i32
    %c0_i32_0 = arith.constant 0 : i32
    %c0_i32_1 = arith.constant 0 : i32
    return %c0_i32, %c0_i32_0 : i32, i32
  }
  func.func @transform_2(%arg0: i32) -> (i32, i32) {
    %c0_i32 = arith.constant 0 : i32
    %c0_i32_0 = arith.constant 0 : i32
    %c0_i32_1 = arith.constant 0 : i32
    return %c0_i32, %c0_i32_0 : i32, i32
  }
  func.func @transform_3(%arg0: i32) -> (i32, i32) {
    %c0_i32 = arith.constant 0 : i32
    %c0_i32_0 = arith.constant 0 : i32
    %c0_i32_1 = arith.constant 0 : i32
    return %c0_i32, %c0_i32_0 : i32, i32
  }
  func.func @transform_4(%arg0: i32) -> (i32, i32) {
    %c0_i32 = arith.constant 0 : i32
    %c0_i32_0 = arith.constant 0 : i32
    %c0_i32_1 = arith.constant 0 : i32
    return %c0_i32, %c0_i32_0 : i32, i32
  }
  func.func @transform_5(%arg0: i32) -> i32 {
    %c0_i32 = arith.constant 0 : i32
    %c0_i32_0 = arith.constant 0 : i32
    return %c0_i32 : i32
  }
  func.func @transform_6(%arg0: i32) -> (i32, i32) {
    %c0_i32 = arith.constant 0 : i32
    %c0_i32_0 = arith.constant 0 : i32
    return %c0_i32, %arg0 : i32, i32
  }
}

</mosaic_0001>

<llo_original>
// kernel: regression_model_forward.1
$region0: #{regression_model_forward.1}
  #allocation0 [shape = 'u32[]', space=smem, size = 0x4, offset = 0x4, fixed_abs, tag = 'smem constant byte address 0x4 - core index']
  #allocation1 [shape = 'u32[144,128]{1,0:T(1,128)}', space=vmem, size = 0x12000, scoped, tag = 'internal scratch']
  #allocation2 [shape = 'f32[1]{0:T(128)S(6)}', space=smem, size = 0x200, scoped, tag = 'scoped memory for regression_model_forward.1']
  %s0 = inlined_call_operand.vmem [shape: bf16[16,32], index: 0, kind: input, shape index: {}]
  %s1 = inlined_call_operand.vmem [shape: bf16[32,128], index: 1, kind: input, shape index: {}]
  %s2 = inlined_call_operand.vmem [shape: bf16[128,64], index: 2, kind: input, shape index: {}]
  %s3 = inlined_call_operand.vmem [shape: bf16[1,64], index: 3, kind: input, shape index: {}]
  %s4 = inlined_call_operand.vmem [shape: f32[1,192], index: 4, kind: input, shape index: {}]
  %s5 = inlined_call_operand.<no memory space> [shape: f32[1], index: 5, kind: input, shape index: {}]
  %s6 = inlined_call_operand.vmem [shape: f32[1,16], index: 6, kind: output, shape index: {}]
  %s7 = sld [smem:[#allocation0]]
  $region34: #{regression_model_forward.1} parent=0
    _
  %s9 = ssub.s32 1, %s7
  %s10 = scalar_select 0, %s9, %s7
  %11 = sst [smem:[#allocation2]] %s5
  // Predicated region
  $region2: #{regression_model_forward.1} parent=0 // pred_check
    _
  $region3: #{regression_model_forward.1} parent=0 // pred_check_branch
    %13 = sbr.rel (0) target = $region5
  $region4: #{regression_model_forward.1} parent=0 // pred_region
    _
  $region5: #{regression_model_forward.1} parent=0 // pred_fallthru
    _
  // Predicated region
  $region6: #{regression_model_forward.1} parent=0 // pred_check
    _
  $region7: #{regression_model_forward.1} parent=0 // pred_check_branch
    %15 = sbr.rel (0) target = $region9
  $region8: #{regression_model_forward.1} parent=0 // pred_region
    _
  $region9: #{regression_model_forward.1} parent=0 // pred_fallthru
    _
  // Predicated region
  $region10: #{regression_model_forward.1} parent=0 // pred_check
    _
  $region11: #{regression_model_forward.1} parent=0 // pred_check_branch
    %17 = sbr.rel (0) target = $region13
  $region12: #{regression_model_forward.1} parent=0 // pred_region
    _
  $region13: #{regression_model_forward.1} parent=0 // pred_fallthru
    _
  // Predicated region
  $region14: #{regression_model_forward.1} parent=0 // pred_check
    _
  $region15: #{regression_model_forward.1} parent=0 // pred_check_branch
    %19 = sbr.rel (0) target = $region17
  $region16: #{regression_model_forward.1} parent=0 // pred_region
    _
  $region17: #{regression_model_forward.1} parent=0 // pred_fallthru
    _
  // Predicated region
  $region18: #{regression_model_forward.1} parent=0 // pred_check
    _
  $region19: #{regression_model_forward.1} parent=0 // pred_check_branch
    %21 = sbr.rel (0) target = $region21
  $region20: #{regression_model_forward.1} parent=0 // pred_region
    _
  $region21: #{regression_model_forward.1} parent=0 // pred_fallthru
    _
  // Predicated region
  $region22: #{regression_model_forward.1} parent=0 // pred_check
    _
  $region23: #{regression_model_forward.1} parent=0 // pred_check_branch
    %23 = sbr.rel (0) target = $region25
  $region24: #{regression_model_forward.1} parent=0 // pred_region
    _
  $region25: #{regression_model_forward.1} parent=0 // pred_fallthru
    _
  %v25 = vld [vmem:[%s0] sm:$0xf]
  %v26 = vld [vmem:[%s0 + $0x4] sm:$0xf]
  %v27 = vld [vmem:[%s4] sm:$0x1]
  %v28 = vld [vmem:[%s4 + $0x1] sm:$0x1]
  %v29 = vld [vmem:[%s1] sm:$0xf]
  %v30 = vld [vmem:[%s1 + $0x4] sm:$0xf]
  %v31 = vld [vmem:[%s1 + $0x8] sm:$0xf]
  %v32 = vld [vmem:[%s1 + $0xc] sm:$0xf]
  %v34 = vlaneseq
  %v35 = vshrl.u32 %v34, 7
  %v36 = vsub.s32 0, %v35
  %v37 = vrot.slane %v27, %v36
  %v41 = vunpack.c.l.b16 %v25
  %v42 = vunpack.c.l.b16 %v26
  %v43 = vpack.c.b16 %v42, %v41
  %v48 = vunpack.c.l.b16 %v29
  %v49 = vunpack.c.l.b16 %v30
  %v50 = vunpack.c.l.b16 %v31
  %v51 = vunpack.c.l.b16 %v32
  %v52 = vpack.c.b16 %v49, %v48
  %v53 = vpack.c.b16 %v51, %v50
  %vm56 = vcmask 261120
  %v58 = vsel %vm56, %v43, 0
  %60 = vmatprep.subr.bf16.mxu0 0
  %61 = vmatpush1.bf16.msra.mxu0 %v52
  %62 = vmatprep.subr.bf16.mxu0 0
  %63 = vmatpush1.bf16.msra.mxu0 %v53
  %64 = vmatprep.subr.bf16.mxu0 0
  %65 = vmatpush1.bf16.msra.mxu0 0
  %66 = vmatprep.subr.bf16.mxu0 0
  %67 = vmatpush1.bf16.msra.mxu0 0
  %68 = vmatprep.subr.bf16.mxu0 0
  %69 = vmatpush1.bf16.msra.mxu0 0
  %70 = vmatprep.subr.bf16.mxu0 0
  %71 = vmatpush1.bf16.msra.mxu0 0
  %72 = vmatprep.subr.bf16.mxu0 0
  %73 = vmatpush1.bf16.msra.mxu0 0
  %74 = vmatprep.subr.bf16.mxu0 0
  %75 = vmatpush1.bf16.msra.mxu0 0
  %76 = vmatprep.subr.bf16.mxu0 0
  %77 = vmatpush1.bf16.msra.mxu0 0
  %78 = vmatprep.subr.bf16.mxu0 0
  %79 = vmatpush1.bf16.msra.mxu0 0
  %80 = vmatprep.subr.bf16.mxu0 0
  %81 = vmatpush1.bf16.msra.mxu0 0
  %82 = vmatprep.subr.bf16.mxu0 0
  %83 = vmatpush1.bf16.msra.mxu0 0
  %84 = vmatprep.subr.bf16.mxu0 0
  %85 = vmatpush1.bf16.msra.mxu0 0
  %86 = vmatprep.subr.bf16.mxu0 0
  %87 = vmatpush1.bf16.msra.mxu0 0
  %88 = vmatprep.subr.bf16.mxu0 0
  %89 = vmatpush1.bf16.msra.mxu0 0
  %90 = vmatprep.subr.bf16.mxu0 0
  %91 = vmatpush1.bf16.msra.mxu0 0
  %92 = vmatprep.mubr.bf16.mxu0 0
  %93 = vmatmul.mubr.bf16.gmra.mrb[0].mxu0 %v58
  %v94 = vpop.f32.mrb[0].mxu0
  %v95 = vadd.f32 %v37, %v94
  %v96 = vpop.f32.mrb[0].mxu0
  %v97 = vpop.f32.mrb[0].mxu0
  %v98 = vadd.f32 %v37, %v97
  %v99 = vpop.f32.mrb[0].mxu0
  %100 = vdwg.mxu0
  %v101 = vmax.f32 %v95, 0.0
  %v102 = vmax.f32 %v98, 0.0
  %v103 = vpack.c.bf16 %v102, %v101
  %v104 = vld [vmem:[%s2] sm:$0xf]
  %v105 = vld [vmem:[%s2 + $0x4] sm:$0xf]
  %v106 = vld [vmem:[%s2 + $0x8] sm:$0xf]
  %v107 = vld [vmem:[%s2 + $0xc] sm:$0xf]
  %v108 = vld [vmem:[%s2 + $0x10] sm:$0xf]
  %v109 = vld [vmem:[%s2 + $0x14] sm:$0xf]
  %v110 = vld [vmem:[%s2 + $0x18] sm:$0xf]
  %v111 = vld [vmem:[%s2 + $0x1c] sm:$0xf]
  %v112 = vld [vmem:[%s2 + $0x20] sm:$0xf]
  %v113 = vld [vmem:[%s2 + $0x24] sm:$0xf]
  %v114 = vld [vmem:[%s2 + $0x28] sm:$0xf]
  %v115 = vld [vmem:[%s2 + $0x2c] sm:$0xf]
  %v116 = vld [vmem:[%s2 + $0x30] sm:$0xf]
  %v117 = vld [vmem:[%s2 + $0x34] sm:$0xf]
  %v118 = vld [vmem:[%s2 + $0x38] sm:$0xf]
  %v119 = vld [vmem:[%s2 + $0x3c] sm:$0xf]
  %v121 = vlaneseq
  %v122 = vshrl.u32 %v121, 7
  %v123 = vsub.s32 0, %v122
  %v124 = vrot.slane %v28, %v123
  %v142 = vunpack.c.l.b16 %v104
  %v143 = vunpack.c.l.b16 %v105
  %v144 = vunpack.c.l.b16 %v106
  %v145 = vunpack.c.l.b16 %v107
  %v146 = vunpack.c.l.b16 %v108
  %v147 = vunpack.c.l.b16 %v109
  %v148 = vunpack.c.l.b16 %v110
  %v149 = vunpack.c.l.b16 %v111
  %v150 = vunpack.c.l.b16 %v112
  %v151 = vunpack.c.l.b16 %v113
  %v152 = vunpack.c.l.b16 %v114
  %v153 = vunpack.c.l.b16 %v115
  %v154 = vunpack.c.l.b16 %v116
  %v155 = vunpack.c.l.b16 %v117
  %v156 = vunpack.c.l.b16 %v118
  %v157 = vunpack.c.l.b16 %v119
  %v158 = vpack.c.b16 %v143, %v142
  %v159 = vpack.c.b16 %v145, %v144
  %v160 = vpack.c.b16 %v147, %v146
  %v161 = vpack.c.b16 %v149, %v148
  %v162 = vpack.c.b16 %v151, %v150
  %v163 = vpack.c.b16 %v153, %v152
  %v164 = vpack.c.b16 %v155, %v154
  %v165 = vpack.c.b16 %v157, %v156
  %174 = vmatprep.subr.bf16.mxu0 0
  %175 = vmatpush1.bf16.msra.mxu0 %v158
  %176 = vmatprep.subr.bf16.mxu0 0
  %177 = vmatpush1.bf16.msra.mxu0 %v159
  %178 = vmatprep.subr.bf16.mxu0 0
  %179 = vmatpush1.bf16.msra.mxu0 %v160
  %180 = vmatprep.subr.bf16.mxu0 0
  %181 = vmatpush1.bf16.msra.mxu0 %v161
  %182 = vmatprep.subr.bf16.mxu0 0
  %183 = vmatpush1.bf16.msra.mxu0 %v162
  %184 = vmatprep.subr.bf16.mxu0 0
  %185 = vmatpush1.bf16.msra.mxu0 %v163
  %186 = vmatprep.subr.bf16.mxu0 0
  %187 = vmatpush1.bf16.msra.mxu0 %v164
  %188 = vmatprep.subr.bf16.mxu0 0
  %189 = vmatpush1.bf16.msra.mxu0 %v165
  %190 = vmatprep.subr.bf16.mxu0 0
  %191 = vmatpush1.bf16.msra.mxu0 0
  %192 = vmatprep.subr.bf16.mxu0 0
  %193 = vmatpush1.bf16.msra.mxu0 0
  %194 = vmatprep.subr.bf16.mxu0 0
  %195 = vmatpush1.bf16.msra.mxu0 0
  %196 = vmatprep.subr.bf16.mxu0 0
  %197 = vmatpush1.bf16.msra.mxu0 0
  %198 = vmatprep.subr.bf16.mxu0 0
  %199 = vmatpush1.bf16.msra.mxu0 0
  %200 = vmatprep.subr.bf16.mxu0 0
  %201 = vmatpush1.bf16.msra.mxu0 0
  %202 = vmatprep.subr.bf16.mxu0 0
  %203 = vmatpush1.bf16.msra.mxu0 0
  %204 = vmatprep.subr.bf16.mxu0 0
  %205 = vmatpush1.bf16.msra.mxu0 0
  %206 = vmatprep.mubr.bf16.mxu0 0
  %207 = vmatmul.mubr.bf16.gmra.mrb[0].mxu0 %v103
  %v208 = vpop.f32.mrb[0].mxu0
  %v209 = vadd.f32 %v124, %v208
  %v210 = vpop.f32.mrb[0].mxu0
  %v211 = vpop.f32.mrb[0].mxu0
  %v212 = vadd.f32 %v124, %v211
  %v213 = vpop.f32.mrb[0].mxu0
  %214 = vdwg.mxu0
  %v215 = vmax.f32 %v209, 0.0
  %v216 = vmax.f32 %v212, 0.0
  %v217 = vld [vmem:[%s3] sm:$0x1]
  %v218 = vpack.c.bf16 %v216, %v215
  %s219 = sld [smem:[#allocation2]]
  %v220 = vstv %s219
  %vm221 = vcmask 523264
  %v223 = vsel %vm221, %v217, 0
  %v226 = vsel %vm221, %v218, 0
  %228 = vmatprep.subr.bf16.mxu0 0
  %229 = vmatpush1.bf16.xpose.msra.mxu0 %v226
  %230 = vmatprep.subr.bf16.mxu0 0
  %231 = vmatpush1.bf16.xpose.msra.mxu0 0
  %232 = vmatprep.subr.bf16.mxu0 0
  %233 = vmatpush1.bf16.xpose.msra.mxu0 0
  %234 = vmatprep.subr.bf16.mxu0 0
  %235 = vmatpush1.bf16.xpose.msra.mxu0 0
  %236 = vmatprep.subr.bf16.mxu0 0
  %237 = vmatpush1.bf16.xpose.msra.mxu0 0
  %238 = vmatprep.subr.bf16.mxu0 0
  %239 = vmatpush1.bf16.xpose.msra.mxu0 0
  %240 = vmatprep.subr.bf16.mxu0 0
  %241 = vmatpush1.bf16.xpose.msra.mxu0 0
  %242 = vmatprep.subr.bf16.mxu0 0
  %243 = vmatpush1.bf16.xpose.msra.mxu0 0
  %244 = vmatprep.subr.bf16.mxu0 0
  %245 = vmatpush1.bf16.xpose.msra.mxu0 0
  %246 = vmatprep.subr.bf16.mxu0 0
  %247 = vmatpush1.bf16.xpose.msra.mxu0 0
  %248 = vmatprep.subr.bf16.mxu0 0
  %249 = vmatpush1.bf16.xpose.msra.mxu0 0
  %250 = vmatprep.subr.bf16.mxu0 0
  %251 = vmatpush1.bf16.xpose.msra.mxu0 0
  %252 = vmatprep.subr.bf16.mxu0 0
  %253 = vmatpush1.bf16.xpose.msra.mxu0 0
  %254 = vmatprep.subr.bf16.mxu0 0
  %255 = vmatpush1.bf16.xpose.msra.mxu0 0
  %256 = vmatprep.subr.bf16.mxu0 0
  %257 = vmatpush1.bf16.xpose.msra.mxu0 0
  %258 = vmatprep.subr.bf16.mxu0 0
  %259 = vmatpush1.bf16.xpose.msra.mxu0 0
  %260 = vmatprep.mubr.bf16.mxu0 0
  %261 = vmatmul.mubr.bf16.gmra.mrb[0].mxu0 %v223
  %v262 = vpop.f32.mrb[0].mxu0
  %v263 = vadd.f32 %v220, %v262
  %v264 = vpop.f32.mrb[0].mxu0
  %v265 = vpop.f32.mrb[0].mxu0
  %v266 = vpop.f32.mrb[0].mxu0
  %267 = vdwg.mxu0
  %vm268 = vcmask 122880
  %269 = vst.msk [vmem:[%s6] sm:$0x1] %vm268, %v263
  // Predicated region
  $region26: #{regression_model_forward.1} parent=0 // pred_check
    _
  $region27: #{regression_model_forward.1} parent=0 // pred_check_branch
    %271 = sbr.rel (0) target = $region29
  $region28: #{regression_model_forward.1} parent=0 // pred_region
    _
  $region29: #{regression_model_forward.1} parent=0 // pred_fallthru
    _
  // Predicated region
  $region30: #{regression_model_forward.1} parent=0 // pred_check
    _
  $region31: #{regression_model_forward.1} parent=0 // pred_check_branch
    %273 = sbr.rel (0) target = $region33
  $region32: #{regression_model_forward.1} parent=0 // pred_region
    _
  $region33: #{regression_model_forward.1} parent=0 // pred_fallthru
    _

</llo_original>
